<compile_context>
chip_gen: v5e
topology: v5e:2x2
jax: 0.10.0
libtpu: 0.0.40
codegen_flags: <defaults>
</compile_context>

<pallas_src>
import jax
import jax.numpy as jnp
from jax.experimental import pallas as pl
from jax.experimental.pallas import tpu as pltpu

LANES = 512          # lane-dense width: multiple of 128 -> unmasked full-line stores
SUBLANES = 8         # f32 sublane granularity
MAX_TILE_ROWS = 1024 # 1024 x 512 f32 = 2 MiB per block


def _logreg_kernel(w_ref, b_ref, x_ref, o_ref):
    # w_ref / b_ref: (1, 1) scalars in SMEM.  x_ref / o_ref: lane-dense VMEM tiles.
    w = w_ref[0, 0]
    b = b_ref[0, 0]
    z = x_ref[...] * w + b                      # Linear(1, 1): scalar MAC on the VPU
    # Exact sigmoid via tanh (single EUP op per element, no approx-recip error):
    # sigmoid(z) = 0.5 * tanh(0.5 * z) + 0.5
    o_ref[...] = 0.5 * jnp.tanh(0.5 * z) + 0.5


def _choose_tile_rows(rows):
    """Pick tile_rows (multiple of 8, <= MAX_TILE_ROWS).

    Aim for >= 2 grid steps whenever there is more than one sublane-row of
    work, so the "parallel" grid axis gives both v7x TensorCores something to
    do; cap the block at 2 MiB so (in + out) x double-buffering stays ~8 MiB
    of VMEM (safe on v5e's 16 MiB scoped default and v7x's 64 MiB VMEM).
    """
    if rows <= SUBLANES:
        return SUBLANES
    half = ((rows // 2) // SUBLANES) * SUBLANES
    return max(SUBLANES, min(MAX_TILE_ROWS, half))


def logistic_regression_forward(x, weight, bias):
    """x: (N, 1) f32, weight: (1, 1) f32, bias: (1,) f32 -> (N, 1) f32."""
    n, f = x.shape
    assert f == 1 and weight.shape == (1, 1) and bias.shape == (1,)
    dtype = jnp.float32

    # Lane-dense re-layout: flatten and pad only up to a whole number of
    # (8, LANES) sublane-rows.  When n is already aligned this is a no-op
    # (static Python branch -- shapes are known at trace time).
    rows = pl.cdiv(pl.cdiv(n, LANES), SUBLANES) * SUBLANES
    n_pad = rows * LANES

    x_flat = x.astype(dtype).reshape(-1)
    if n_pad != n:
        # Padded lanes are zeros -> they compute sigmoid(b) and are discarded
        # by the trailing slice; never reduce over the padded slab.
        x_flat = jnp.pad(x_flat, (0, n_pad - n))
    x2d = x_flat.reshape(rows, LANES)

    tile_rows = _choose_tile_rows(rows)
    grid = (pl.cdiv(rows, tile_rows),)   # ragged last block handled by Pallas

    w_smem = weight.reshape(1, 1).astype(dtype)
    b_smem = bias.reshape(1, 1).astype(dtype)

    cost = pl.CostEstimate(
        flops=4 * n_pad,                 # MAC + tanh scale/shift
        transcendentals=n_pad,           # one tanh per element
        bytes_accessed=2 * 4 * n_pad,    # stream x in, y out (f32)
    )

    out2d = pl.pallas_call(
        _logreg_kernel,
        out_shape=jax.ShapeDtypeStruct((rows, LANES), dtype),
        grid=grid,
        in_specs=[
            pl.BlockSpec((1, 1), lambda i: (0, 0), memory_space=pltpu.SMEM),  # weight
            pl.BlockSpec((1, 1), lambda i: (0, 0), memory_space=pltpu.SMEM),  # bias
            pl.BlockSpec((tile_rows, LANES), lambda i: (i, 0)),               # x tile
        ],
        out_specs=pl.BlockSpec((tile_rows, LANES), lambda i: (i, 0)),
        compiler_params=pltpu.CompilerParams(
            # Batch axis is embarrassingly parallel: lets v7x shard it across
            # its 2 TensorCores; harmless no-op on v5e/v6e.
            dimension_semantics=("parallel",),
            vmem_limit_bytes=32 * 1024 * 1024,
            # Let any wrapper-side pad fuse into the x input of the call.
            allow_input_fusion=[False, False, True],
        ),
        cost_estimate=cost,
    )(w_smem, b_smem, x2d)

    out_flat = out2d.reshape(-1)
    if n_pad != n:
        out_flat = out_flat[:n]
    return out_flat.reshape(n, 1)


if __name__ == "__main__":
    key = jax.random.PRNGKey(0)
    kx, kw, kb, kx2 = jax.random.split(key, 4)

    # Deterministic "nn.Linear(1, 1)" parameters (synthetic init, not a checkpoint).
    weight = jax.random.uniform(kw, (1, 1), minval=-1.0, maxval=1.0, dtype=jnp.float32)
    bias = jax.random.uniform(kb, (1,), minval=-1.0, maxval=1.0, dtype=jnp.float32)

    # Small demo batch consistent with the module: (batch=8, feature=1).
    x = jax.random.normal(kx, (8, 1), dtype=jnp.float32)
    y = logistic_regression_forward(x, weight, bias)
    jax.block_until_ready(y)
    y_ref = jax.nn.sigmoid(x @ weight.T + bias)
    assert y.shape == (8, 1)
    assert jnp.allclose(y, y_ref, atol=1e-4), "mismatch vs reference (small batch)"

    # Second run with a non-aligned batch to exercise the pad/slice path.
    x2 = jax.random.normal(kx2, (3000, 1), dtype=jnp.float32)
    y2 = logistic_regression_forward(x2, weight, bias)
    jax.block_until_ready(y2)
    y2_ref = jax.nn.sigmoid(x2 @ weight.T + bias)
    assert y2.shape == (3000, 1)
    assert jnp.allclose(y2, y2_ref, atol=1e-4), "mismatch vs reference (padded batch)"

    print("KERNEL_OK")
</pallas_src>

<mosaic_0001>
module attributes {stable_mosaic.version = 11 : i64} {
  func.func @_logreg_kernel(%arg0: i32, %arg1: memref<1x1xf32, #tpu.memory_space<smem>>, %arg2: memref<1x1xf32, #tpu.memory_space<smem>>, %arg3: memref<8x512xf32, #tpu.memory_space<vmem>>, %arg4: memref<8x512xf32, #tpu.memory_space<vmem>>) attributes {dimension_semantics = [#tpu.dimension_semantics<parallel>], iteration_bounds = array<i64: 1>, scalar_prefetch = 0 : i64, scratch_operands = 0 : i64, tpu.core_type = #tpu.core_type<tc>, window_params = [{transform_indices = @transform_0, window_bounds = array<i64: 1, 1>}, {transform_indices = @transform_1, window_bounds = array<i64: 1, 1>}, {transform_indices = @transform_2, window_bounds = array<i64: 8, 512>}, {transform_indices = @transform_3, window_bounds = array<i64: 8, 512>}]} {
    %c0 = arith.constant 0 : index
    %c0_0 = arith.constant 0 : index
    %0 = memref.load %arg1[%c0, %c0_0] : memref<1x1xf32, #tpu.memory_space<smem>>
    %c0_1 = arith.constant 0 : index
    %c0_2 = arith.constant 0 : index
    %1 = memref.load %arg2[%c0_1, %c0_2] : memref<1x1xf32, #tpu.memory_space<smem>>
    %c0_3 = arith.constant 0 : index
    %c0_4 = arith.constant 0 : index
    %2 = vector.load %arg3[%c0_3, %c0_4] : memref<8x512xf32, #tpu.memory_space<vmem>>, vector<8x512xf32>
    %3 = vector.broadcast %0 : f32 to vector<8x512xf32>
    %4 = arith.mulf %2, %3 : vector<8x512xf32>
    %5 = vector.broadcast %1 : f32 to vector<8x512xf32>
    %6 = arith.addf %4, %5 : vector<8x512xf32>
    %cst = arith.constant 5.000000e-01 : f32
    %7 = vector.broadcast %cst : f32 to vector<8x512xf32>
    %8 = arith.mulf %7, %6 : vector<8x512xf32>
    %9 = math.tanh %8 : vector<8x512xf32>
    %cst_5 = arith.constant 5.000000e-01 : f32
    %10 = vector.broadcast %cst_5 : f32 to vector<8x512xf32>
    %11 = arith.mulf %10, %9 : vector<8x512xf32>
    %cst_6 = arith.constant 5.000000e-01 : f32
    %12 = vector.broadcast %cst_6 : f32 to vector<8x512xf32>
    %13 = arith.addf %11, %12 : vector<8x512xf32>
    %c0_7 = arith.constant 0 : index
    %c0_8 = arith.constant 0 : index
    %14 = vector.load %arg4[%c0_7, %c0_8] : memref<8x512xf32, #tpu.memory_space<vmem>>, vector<8x512xf32>
    tpu.vector_store %arg4[%c0_7, %c0_8], %13 {strides = array<i32>} : memref<8x512xf32, #tpu.memory_space<vmem>>, vector<8x512xf32>,
    return
  }
  func.func @transform_0(%arg0: i32) -> (i32, i32) {
    %c0_i32 = arith.constant 0 : i32
    %c0_i32_0 = arith.constant 0 : i32
    %c0_i32_1 = arith.constant 0 : i32
    return %c0_i32, %c0_i32_0 : i32, i32
  }
  func.func @transform_1(%arg0: i32) -> (i32, i32) {
    %c0_i32 = arith.constant 0 : i32
    %c0_i32_0 = arith.constant 0 : i32
    %c0_i32_1 = arith.constant 0 : i32
    return %c0_i32, %c0_i32_0 : i32, i32
  }
  func.func @transform_2(%arg0: i32) -> (i32, i32) {
    %c0_i32 = arith.constant 0 : i32
    %c0_i32_0 = arith.constant 0 : i32
    return %arg0, %c0_i32 : i32, i32
  }
  func.func @transform_3(%arg0: i32) -> (i32, i32) {
    %c0_i32 = arith.constant 0 : i32
    %c0_i32_0 = arith.constant 0 : i32
    return %arg0, %c0_i32 : i32, i32
  }
}

</mosaic_0001>

<llo_original>
// kernel: tpu_custom_call.1
$region0: #{tpu_custom_call.1}
  #allocation0 [shape = 'u32[]', space=smem, size = 0x4, offset = 0x4, fixed_abs, tag = 'smem constant byte address 0x4 - core index']
  #allocation1 [shape = 'u32[72,128]{1,0:T(1,128)}', space=vmem, size = 0x9000, scoped, tag = 'internal scratch']
  #allocation2 [shape = 'f32[1,1]{1,0:T(1,128)S(6)}', space=smem, size = 0x200, scoped, tag = 'scoped memory for tpu_custom_call.1']
  #allocation3 [shape = 'f32[1,1]{1,0:T(1,128)S(6)}', space=smem, size = 0x200, scoped, tag = 'scoped memory for tpu_custom_call.1']
  %s0 = inlined_call_operand.<no memory space> [shape: f32[1,1], index: 0, kind: input, shape index: {}]
  %s1 = inlined_call_operand.<no memory space> [shape: f32[1,1], index: 1, kind: input, shape index: {}]
  %s2 = inlined_call_operand.hbm [shape: f32[8,512], index: 2, kind: input, shape index: {}]
  %s3 = inlined_call_operand.hbm [shape: f32[8,512], index: 3, kind: output, shape index: {}]
  %s4 = sld [smem:[#allocation0]]
  $region26: #{tpu_custom_call.1} parent=0
    _
  %s6 = ssub.s32 1, %s4
  %s7 = scalar_select 0, %s6, %s4
  %8 = sst [smem:[#allocation2]] %s0
  %9 = sst [smem:[#allocation3]] %s1
  $region1: #{tpu_custom_call.1} parent=0
    #allocation4 [shape = 'u8[16384]{0}', space=vmem, size = 0x4000, scoped, tag = 'input window, operand 2, single buffered']
    #allocation5 [shape = 's32[1]{0}', space=sflag, size = 0x4, scoped, tag = 'scoped memory for tpu_custom_call.1']
    #allocation6 [shape = 's32[1]{0}', space=sflag, size = 0x4, scoped, tag = 'scoped memory for tpu_custom_call.1']
    #allocation7 [shape = 'u8[16384]{0}', space=vmem, size = 0x4000, scoped, tag = 'output window, operand 0, single buffered']
    %10 = vsyncpa [#allocation5], 0
    %11 = vsyncpa [#allocation6], 0
    // Predicated region
    $region2: #{tpu_custom_call.1} parent=1 // pred_check
      _
    $region3: #{tpu_custom_call.1} parent=1 // pred_check_branch
      %13 = sbr.rel (0) target = $region5
    $region4: #{tpu_custom_call.1} parent=1 // pred_region
      _
    $region5: #{tpu_custom_call.1} parent=1 // pred_fallthru
      _
    // Predicated region
    $region6: #{tpu_custom_call.1} parent=1 // pred_check
      _
    $region7: #{tpu_custom_call.1} parent=1 // pred_check_branch
      %15 = sbr.rel (0) target = $region9
    $region8: #{tpu_custom_call.1} parent=1 // pred_region
      _
    $region9: #{tpu_custom_call.1} parent=1 // pred_fallthru
      _
    // Predicated region
    $region10: #{tpu_custom_call.1} parent=1 // pred_check
      _
    $region11: #{tpu_custom_call.1} parent=1 // pred_check_branch
      %17 = sbr.rel (0) target = $region13
    $region12: #{tpu_custom_call.1} parent=1 // pred_region
      %19 = vsyncadd [#allocation5], 0
      %s21 = sshll.u32 %s2, 4
      %s22 = int_to_ptr.hbm [resolvable:$true] %s21
      %s23 = sshll.u32 [#allocation4], 4
      %s24 = int_to_ptr.vmem [resolvable:$true] %s23
      %26 = dma.hbm_to_vmem [thread:$0]  %s22, 512, %s24, [#allocation5]
    $region13: #{tpu_custom_call.1} parent=1 // pred_fallthru
      _
    // Predicated region
    $region14: #{tpu_custom_call.1} parent=1 // pred_check
      _
    $region15: #{tpu_custom_call.1} parent=1 // pred_check_branch
      %28 = sbr.rel (0) target = $region17
    $region16: #{tpu_custom_call.1} parent=1 // pred_region
      %30 = dma.done [#allocation5], 512
    $region17: #{tpu_custom_call.1} parent=1 // pred_fallthru
      _
    %s31 = sld [smem:[#allocation2]]
    %s32 = sld [smem:[#allocation3]]
    %v33 = vld [vmem:[#allocation4] sm:$0xff]
    %v34 = vld [vmem:[#allocation4 + $0x8] sm:$0xff]
    %v35 = vld [vmem:[#allocation4 + $0x10] sm:$0xff]
    %v36 = vld [vmem:[#allocation4 + $0x18] sm:$0xff]
    %v37 = vstv %s31
    %v38 = vmul.f32 %v33, %v37
    %v39 = vmul.f32 %v34, %v37
    %v40 = vmul.f32 %v35, %v37
    %v41 = vmul.f32 %v36, %v37
    %v42 = vstv %s32
    %v43 = vadd.f32 %v38, %v42
    %v44 = vadd.f32 %v39, %v42
    %v45 = vadd.f32 %v40, %v42
    %v46 = vadd.f32 %v41, %v42
    %v47 = vmul.f32 %v43, 0.5
    %v48 = vmul.f32 %v44, 0.5
    %v49 = vmul.f32 %v45, 0.5
    %v50 = vmul.f32 %v46, 0.5
    %v51 = vtanh.pop %v47
    %v52 = vtanh.pop %v48
    %v53 = vtanh.pop %v49
    %v54 = vtanh.pop %v50
    %v55 = vmul.f32 %v51, 0.5
    %v56 = vmul.f32 %v52, 0.5
    %v57 = vmul.f32 %v53, 0.5
    %v58 = vmul.f32 %v54, 0.5
    %v59 = vadd.f32 %v55, 0.5
    %v60 = vadd.f32 %v56, 0.5
    %v61 = vadd.f32 %v57, 0.5
    %v62 = vadd.f32 %v58, 0.5
    %63 = vst [vmem:[#allocation7] sm:$0xff] %v59
    %64 = vst [vmem:[#allocation7 + $0x8] sm:$0xff] %v60
    %65 = vst [vmem:[#allocation7 + $0x10] sm:$0xff] %v61
    %66 = vst [vmem:[#allocation7 + $0x18] sm:$0xff] %v62
    // Predicated region
    $region18: #{tpu_custom_call.1} parent=1 // pred_check
      _
    $region19: #{tpu_custom_call.1} parent=1 // pred_check_branch
      %68 = sbr.rel (0) target = $region21
    $region20: #{tpu_custom_call.1} parent=1 // pred_region
      %70 = vsyncadd [#allocation6], 0
      %s72 = sshll.u32 [#allocation7], 4
      %s73 = int_to_ptr.vmem [resolvable:$true] %s72
      %s74 = sshll.u32 %s3, 4
      %s75 = int_to_ptr.hbm [resolvable:$true] %s74
      %77 = dma.vmem_to_hbm [thread:$0]  %s73, 512, %s75, [#allocation6]
    $region21: #{tpu_custom_call.1} parent=1 // pred_fallthru
      _
    // Predicated region
    $region22: #{tpu_custom_call.1} parent=1 // pred_check
      _
    $region23: #{tpu_custom_call.1} parent=1 // pred_check_branch
      %79 = sbr.rel (0) target = $region25
    $region24: #{tpu_custom_call.1} parent=1 // pred_region
      %81 = dma.done [#allocation6], 512
    $region25: #{tpu_custom_call.1} parent=1 // pred_fallthru
      _
    %82 = vsyncpa [#allocation5], 1
    %83 = vsyncpa [#allocation6], 1

</llo_original>
